<compile_context>
chip_gen: v5e
topology: v5e:2x2
jax: 0.10.0
libtpu: 0.0.40
codegen_flags: <defaults>
</compile_context>

<pallas_src>
import functools

import jax
import jax.numpy as jnp
from jax.experimental import pallas as pl
from jax.experimental.pallas import tpu as pltpu

EPS = 1e-5  # nn.LayerNorm default


# ----------------------------- helpers ---------------------------------------

def _round_up(n, m):
    return ((n + m - 1) // m) * m


def _cdiv(a, b):
    return (a + b - 1) // b


# ----------------------------- kernel ---------------------------------------

def _encoder_fused_kernel(x_ref, w_ref, w1_ref, b1_ref, w2_ref, vec_ref, o_ref,
                          *, d_real, ff_chunk):
    xf = x_ref[...]                       # (tm, Dp) f32 rows
    mm_dtype = w_ref.dtype                # weights pre-cast on host (bf16/f32)
    dp = xf.shape[-1]

    # packed (8, Dp) f32 vectors: [bm+br, b2, g1, be1, g2, be2, 0, 0]
    b_mr = vec_ref[0:1, :]
    b2 = vec_ref[1:2, :]
    g1 = vec_ref[2:3, :]
    be1 = vec_ref[3:4, :]
    g2 = vec_ref[4:5, :]
    be2 = vec_ref[5:6, :]

    # Mask for real feature lanes (only needed when D was padded up to 128).
    if d_real == dp:
        lane_mask = None
    else:
        lane_mask = jax.lax.broadcasted_iota(jnp.int32, (1, dp), 1) < d_real

    inv_d = 1.0 / d_real

    def layernorm(v, g, b):
        # Two-pass statistics (better conditioned than E[x^2]-E[x]^2); padded
        # lanes are masked out of the centered value so they stay exactly 0.
        mu = jnp.sum(v, axis=-1, keepdims=True) * inv_d
        xc = v - mu
        if lane_mask is not None:
            xc = jnp.where(lane_mask, xc, 0.0)
        var = jnp.sum(xc * xc, axis=-1, keepdims=True) * inv_d
        return xc * jax.lax.rsqrt(var + EPS) * g + b

    xm = xf.astype(mm_dtype)

    # mamba / mamba_r stand-ins folded into ONE matmul: both branches consume
    # the same rows, so mamba(x) + mamba_r(x.flip(1)).flip(1)
    #   == x @ (wm + wr) + (bm + br)   (weights pre-summed in the wrapper).
    # TODO(synk): real mamba / mamba_r are external sequence mixers (not
    # defined in this module); they would need their own sequence-aware kernels.
    m = jnp.dot(xm, w_ref[...], preferred_element_type=jnp.float32) + b_mr

    # x = norm1(x + new_x)      (dropout = identity in eval mode)
    x1 = layernorm(xf + m, g1, be1)
    x1m = x1.astype(mm_dtype)

    # FFN: y = conv2(relu(conv1(x))) as per-token matmuls, chunked over d_ff so
    # the ReLU intermediate never exceeds (tm, ff_chunk) f32 in VMEM.  Chunk
    # count is kept <= 8 so the statically unrolled loop stays vreg-friendly.
    dffp = w1_ref.shape[1]
    y = jnp.zeros(xf.shape, jnp.float32)          # f32 accumulator
    for c0 in range(0, dffp, ff_chunk):
        cs = min(ff_chunk, dffp - c0)
        h = jnp.dot(x1m, w1_ref[:, c0:c0 + cs],
                    preferred_element_type=jnp.float32) + b1_ref[:, c0:c0 + cs]
        h = jnp.maximum(h, 0.0).astype(mm_dtype)
        y = y + jnp.dot(h, w2_ref[c0:c0 + cs, :],
                        preferred_element_type=jnp.float32)
    y = y + b2

    # norm2(x + y) — lane-dense store (Dp is a multiple of 128).
    o_ref[...] = layernorm(x1 + y, g2, be2).astype(o_ref.dtype)


# ----------------------------- wrapper ---------------------------------------

def encoder_layer(x, p, *, tm=512, ff_chunk=512, matmul_dtype=jnp.bfloat16):
    """x: (B, L, D) float32 -> (out (B, L, D) float32, attn=1)."""
    B, L, D = x.shape
    d_ff = p["w1"].shape[1]
    M = B * L

    Dp = _round_up(D, 128)       # lane-dense feature dim
    dffp = _round_up(d_ff, 128)  # lane-dense hidden dim

    # --- fold + pad + pre-cast parameters once on the host -------------------
    w_mr = jnp.pad(p["wm"] + p["wr"],
                   ((0, Dp - D), (0, Dp - D))).astype(matmul_dtype)
    w1 = jnp.pad(p["w1"], ((0, Dp - D), (0, dffp - d_ff))).astype(matmul_dtype)
    w2 = jnp.pad(p["w2"], ((0, dffp - d_ff), (0, Dp - D))).astype(matmul_dtype)
    b1 = jnp.pad(p["b1"].astype(jnp.float32), ((0, 0), (0, dffp - d_ff)))

    # Pack the six (1, D) f32 bias/LN vectors into one (8, Dp) array.
    vec_rows = [p["bm"] + p["br"], p["b2"], p["g1"], p["be1"], p["g2"], p["be2"]]
    vecs = jnp.zeros((8, Dp), jnp.float32)
    for r, v in enumerate(vec_rows):
        vecs = vecs.at[r, :D].set(v.reshape(-1).astype(jnp.float32))

    # --- row tiling: big tiles, even block count (v7x has 2 TensorCores) -----
    x2 = x.reshape(M, D).astype(jnp.float32)
    rows8 = _round_up(M, 8)
    n_blocks = max(1, _cdiv(rows8, min(tm, rows8)))
    if n_blocks % 2 == 1 and rows8 >= 16:
        n_blocks += 1
    tm_eff = _round_up(_cdiv(rows8, n_blocks), 8)
    m_pad = tm_eff * n_blocks
    if m_pad != M or Dp != D:
        x2 = jnp.pad(x2, ((0, m_pad - M), (0, Dp - D)))

    # d_ff chunking: 128-aligned chunks, unrolled loop kept short (<= 8 iters).
    ff_chunk = _round_up(min(ff_chunk, dffp), 128)
    if _cdiv(dffp, ff_chunk) > 8:
        ff_chunk = _round_up(_cdiv(dffp, 8), 128)

    kernel = functools.partial(_encoder_fused_kernel,
                               d_real=D, ff_chunk=ff_chunk)

    wbytes = jnp.dtype(matmul_dtype).itemsize
    cost = pl.CostEstimate(
        flops=2 * m_pad * Dp * (Dp + 2 * dffp),
        transcendentals=2 * m_pad,
        bytes_accessed=(2 * m_pad * Dp * 4
                        + (Dp * Dp + 2 * Dp * dffp) * wbytes
                        + (8 * Dp + dffp) * 4),
    )

    # Weights / bias vectors: whole-array VMEM residents (copied in once,
    # single-buffered, never re-DMA'd or re-cast per grid step).
    vmem_resident = pl.BlockSpec(memory_space=pltpu.MemorySpace.VMEM)

    out = pl.pallas_call(
        kernel,
        out_shape=jax.ShapeDtypeStruct((m_pad, Dp), jnp.float32),
        grid=(n_blocks,),
        in_specs=[
            pl.BlockSpec((tm_eff, Dp), lambda i: (i, 0)),   # x rows (pipelined)
            vmem_resident,                                  # folded mamba weight
            vmem_resident,                                  # conv1 weight
            vmem_resident,                                  # conv1 bias
            vmem_resident,                                  # conv2 weight
            vmem_resident,                                  # packed bias/LN vectors
        ],
        out_specs=pl.BlockSpec((tm_eff, Dp), lambda i: (i, 0)),
        compiler_params=pltpu.CompilerParams(
            dimension_semantics=("parallel",),
            # 48 MiB: leaves headroom under v7x's 64 MiB physical per-TC VMEM
            # while comfortably raising the default scoped limit on v5e/v6e.
            vmem_limit_bytes=48 * 1024 * 1024,
        ),
        cost_estimate=cost,
    )(x2, w_mr, w1, b1, w2, vecs)

    return out[:M, :D].reshape(B, L, D), 1


# ----------------------------- reference (pure JAX) ---------------------------

def encoder_layer_ref(x, p):
    mx = x @ p["wm"] + p["bm"]
    mr = jnp.flip(jnp.flip(x, axis=1) @ p["wr"] + p["br"], axis=1)
    x = x + mx + mr

    def ln(v, g, b):
        mu = v.mean(-1, keepdims=True)
        var = ((v - mu) ** 2).mean(-1, keepdims=True)
        return (v - mu) / jnp.sqrt(var + EPS) * g + b

    x = ln(x, p["g1"], p["be1"])
    y = jnp.maximum(x @ p["w1"] + p["b1"], 0.0)
    y = y @ p["w2"] + p["b2"]
    return ln(x + y, p["g2"], p["be2"]), 1


# ----------------------------- main -------------------------------------------

if __name__ == "__main__":
    B, L, d_model = 2, 8, 32
    d_ff = 4 * d_model  # 128

    key = jax.random.PRNGKey(0)
    ks = jax.random.split(key, 8)
    s = 0.05
    params = {
        # mamba stand-in linears (d_model -> d_model)
        "wm": jax.random.normal(ks[0], (d_model, d_model), jnp.float32) * s,
        "bm": jax.random.normal(ks[1], (1, d_model), jnp.float32) * s,
        "wr": jax.random.normal(ks[2], (d_model, d_model), jnp.float32) * s,
        "br": jax.random.normal(ks[3], (1, d_model), jnp.float32) * s,
        # conv1: Conv1d(d_model, d_ff, 1)  -> stored as (d_model, d_ff)
        "w1": jax.random.normal(ks[4], (d_model, d_ff), jnp.float32) * s,
        "b1": jax.random.normal(ks[5], (1, d_ff), jnp.float32) * s,
        # conv2: Conv1d(d_ff, d_model, 1)  -> stored as (d_ff, d_model)
        "w2": jax.random.normal(ks[6], (d_ff, d_model), jnp.float32) * s,
        "b2": jnp.zeros((1, d_model), jnp.float32),
        # LayerNorm params (PyTorch default init)
        "g1": jnp.ones((1, d_model), jnp.float32),
        "be1": jnp.zeros((1, d_model), jnp.float32),
        "g2": jnp.ones((1, d_model), jnp.float32),
        "be2": jnp.zeros((1, d_model), jnp.float32),
    }

    x = jax.random.normal(ks[7], (B, L, d_model), jnp.float32)
    ref, _ = encoder_layer_ref(x, params)

    # Production path: bf16 MXU inputs, f32 accumulation (right setting on
    # v5e / v6e / v7x; accumulation is f32 either way).
    out_bf16, attn = encoder_layer(x, params, matmul_dtype=jnp.bfloat16)
    out_bf16 = jax.block_until_ready(out_bf16)
    assert out_bf16.shape == (B, L, d_model)
    assert attn == 1
    assert jnp.allclose(out_bf16, ref, atol=5e-2, rtol=5e-2), \
        "bf16 path mismatch vs reference"

    # Validation-only strict path: f32 MXU inputs.
    out_f32, _ = encoder_layer(x, params, matmul_dtype=jnp.float32)
    out_f32 = jax.block_until_ready(out_f32)
    assert jnp.allclose(out_f32, ref, atol=1e-4, rtol=1e-4), \
        "f32 path mismatch vs reference"

    print("KERNEL_OK")
</pallas_src>

<mosaic_0001>
module attributes {stable_mosaic.version = 11 : i64} {
  func.func @_encoder_fused_kernel(%arg0: i32, %arg1: memref<8x128xf32, #tpu.memory_space<vmem>>, %arg2: memref<128x128xbf16, #tpu.memory_space<vmem>>, %arg3: memref<128x128xbf16, #tpu.memory_space<vmem>>, %arg4: memref<1x128xf32, #tpu.memory_space<vmem>>, %arg5: memref<128x128xbf16, #tpu.memory_space<vmem>>, %arg6: memref<8x128xf32, #tpu.memory_space<vmem>>, %arg7: memref<8x128xf32, #tpu.memory_space<vmem>>) attributes {dimension_semantics = [#tpu.dimension_semantics<parallel>], iteration_bounds = array<i64: 2>, scalar_prefetch = 0 : i64, scratch_operands = 0 : i64, tpu.core_type = #tpu.core_type<tc>, window_params = [{transform_indices = @transform_0, window_bounds = array<i64: 8, 128>}, {pipeline_mode = #tpu.pipeline_mode<synchronous>, transform_indices = @transform_1, window_bounds = array<i64: 128, 128>}, {pipeline_mode = #tpu.pipeline_mode<synchronous>, transform_indices = @transform_2, window_bounds = array<i64: 128, 128>}, {pipeline_mode = #tpu.pipeline_mode<synchronous>, transform_indices = @transform_3, window_bounds = array<i64: 1, 128>}, {pipeline_mode = #tpu.pipeline_mode<synchronous>, transform_indices = @transform_4, window_bounds = array<i64: 128, 128>}, {pipeline_mode = #tpu.pipeline_mode<synchronous>, transform_indices = @transform_5, window_bounds = array<i64: 8, 128>}, {transform_indices = @transform_6, window_bounds = array<i64: 8, 128>}]} {
    %c0 = arith.constant 0 : index
    %c0_0 = arith.constant 0 : index
    %0 = vector.load %arg1[%c0, %c0_0] : memref<8x128xf32, #tpu.memory_space<vmem>>, vector<8x128xf32>
    %c0_1 = arith.constant 0 : index
    %c0_2 = arith.constant 0 : index
    %1 = vector.load %arg6[%c0_1, %c0_2] : memref<8x128xf32, #tpu.memory_space<vmem>>, vector<1x128xf32>
    %c1 = arith.constant 1 : index
    %c0_3 = arith.constant 0 : index
    %2 = vector.load %arg6[%c1, %c0_3] : memref<8x128xf32, #tpu.memory_space<vmem>>, vector<1x128xf32>
    %c2 = arith.constant 2 : index
    %c0_4 = arith.constant 0 : index
    %3 = vector.load %arg6[%c2, %c0_4] : memref<8x128xf32, #tpu.memory_space<vmem>>, vector<1x128xf32>
    %c3 = arith.constant 3 : index
    %c0_5 = arith.constant 0 : index
    %4 = vector.load %arg6[%c3, %c0_5] : memref<8x128xf32, #tpu.memory_space<vmem>>, vector<1x128xf32>
    %c4 = arith.constant 4 : index
    %c0_6 = arith.constant 0 : index
    %5 = vector.load %arg6[%c4, %c0_6] : memref<8x128xf32, #tpu.memory_space<vmem>>, vector<1x128xf32>
    %c5 = arith.constant 5 : index
    %c0_7 = arith.constant 0 : index
    %6 = vector.load %arg6[%c5, %c0_7] : memref<8x128xf32, #tpu.memory_space<vmem>>, vector<1x128xf32>
    %7 = tpu.iota {dimensions = array<i32: 1>} : vector<1x128xi32>
    %c32_i32 = arith.constant 32 : i32
    %8 = vector.broadcast %c32_i32 : i32 to vector<1x128xi32>
    %9 = arith.cmpi slt, %7, %8 : vector<1x128xi32>
    %10 = arith.truncf %0 : vector<8x128xf32> to vector<8x128xbf16>
    %c0_8 = arith.constant 0 : index
    %c0_9 = arith.constant 0 : index
    %11 = vector.load %arg2[%c0_8, %c0_9] : memref<128x128xbf16, #tpu.memory_space<vmem>>, vector<128x128xbf16>
    %cst = arith.constant dense<0.000000e+00> : vector<8x128xf32>
    %12 = tpu.matmul %10, %11, %cst {dimension_numbers = #tpu.dot_dimension_numbers<[1], [0], [0], [1], [0, 0, 1, 1], [], []>} : vector<8x128xbf16>, vector<128x128xbf16>, vector<8x128xf32> -> vector<8x128xf32>
    %13 = vector.broadcast %1 : vector<1x128xf32> to vector<8x128xf32>
    %14 = arith.addf %12, %13 : vector<8x128xf32>
    %15 = arith.addf %0, %14 : vector<8x128xf32>
    %cst_10 = arith.constant dense<0.000000e+00> : vector<8xf32>
    %16 = vector.multi_reduction <add>, %15, %cst_10 [1] : vector<8x128xf32> to vector<8xf32>
    %17 = vector.shape_cast %16 : vector<8xf32> to vector<8x1xf32>
    %cst_11 = arith.constant 3.125000e-02 : f32
    %18 = vector.broadcast %cst_11 : f32 to vector<8x1xf32>
    %19 = arith.mulf %17, %18 : vector<8x1xf32>
    %20 = vector.broadcast %19 : vector<8x1xf32> to vector<8x128xf32>
    %21 = arith.subf %15, %20 : vector<8x128xf32>
    %cst_12 = arith.constant 0.000000e+00 : f32
    %22 = vector.shape_cast %9 : vector<1x128xi1> to vector<1x128xi1>
    %23 = vector.broadcast %22 : vector<1x128xi1> to vector<8x128xi1>
    %24 = vector.broadcast %cst_12 : f32 to vector<8x128xf32>
    %25 = arith.select %23, %21, %24 : vector<8x128xi1>, vector<8x128xf32>
    %26 = arith.mulf %25, %25 : vector<8x128xf32>
    %cst_13 = arith.constant dense<0.000000e+00> : vector<8xf32>
    %27 = vector.multi_reduction <add>, %26, %cst_13 [1] : vector<8x128xf32> to vector<8xf32>
    %28 = vector.shape_cast %27 : vector<8xf32> to vector<8x1xf32>
    %cst_14 = arith.constant 3.125000e-02 : f32
    %29 = vector.broadcast %cst_14 : f32 to vector<8x1xf32>
    %30 = arith.mulf %28, %29 : vector<8x1xf32>
    %cst_15 = arith.constant 9.99999974E-6 : f32
    %31 = vector.broadcast %cst_15 : f32 to vector<8x1xf32>
    %32 = arith.addf %30, %31 : vector<8x1xf32>
    %33 = math.rsqrt %32 : vector<8x1xf32>
    %34 = vector.broadcast %33 : vector<8x1xf32> to vector<8x128xf32>
    %35 = arith.mulf %25, %34 : vector<8x128xf32>
    %36 = vector.broadcast %3 : vector<1x128xf32> to vector<8x128xf32>
    %37 = arith.mulf %35, %36 : vector<8x128xf32>
    %38 = vector.broadcast %4 : vector<1x128xf32> to vector<8x128xf32>
    %39 = arith.addf %37, %38 : vector<8x128xf32>
    %40 = arith.truncf %39 : vector<8x128xf32> to vector<8x128xbf16>
    %cst_16 = arith.constant 0.000000e+00 : f32
    %41 = vector.broadcast %cst_16 : f32 to vector<8x128xf32>
    %c0_17 = arith.constant 0 : index
    %c0_18 = arith.constant 0 : index
    %42 = vector.load %arg3[%c0_17, %c0_18] : memref<128x128xbf16, #tpu.memory_space<vmem>>, vector<128x128xbf16>
    %cst_19 = arith.constant dense<0.000000e+00> : vector<8x128xf32>
    %43 = tpu.matmul %40, %42, %cst_19 {dimension_numbers = #tpu.dot_dimension_numbers<[1], [0], [0], [1], [0, 0, 1, 1], [], []>} : vector<8x128xbf16>, vector<128x128xbf16>, vector<8x128xf32> -> vector<8x128xf32>
    %c0_20 = arith.constant 0 : index
    %c0_21 = arith.constant 0 : index
    %44 = vector.load %arg4[%c0_20, %c0_21] : memref<1x128xf32, #tpu.memory_space<vmem>>, vector<1x128xf32>
    %45 = vector.broadcast %44 : vector<1x128xf32> to vector<8x128xf32>
    %46 = arith.addf %43, %45 : vector<8x128xf32>
    %cst_22 = arith.constant 0.000000e+00 : f32
    %47 = vector.broadcast %cst_22 : f32 to vector<8x128xf32>
    %48 = arith.maximumf %46, %47 : vector<8x128xf32>
    %49 = arith.truncf %48 : vector<8x128xf32> to vector<8x128xbf16>
    %c0_23 = arith.constant 0 : index
    %c0_24 = arith.constant 0 : index
    %50 = vector.load %arg5[%c0_23, %c0_24] : memref<128x128xbf16, #tpu.memory_space<vmem>>, vector<128x128xbf16>
    %cst_25 = arith.constant dense<0.000000e+00> : vector<8x128xf32>
    %51 = tpu.matmul %49, %50, %cst_25 {dimension_numbers = #tpu.dot_dimension_numbers<[1], [0], [0], [1], [0, 0, 1, 1], [], []>} : vector<8x128xbf16>, vector<128x128xbf16>, vector<8x128xf32> -> vector<8x128xf32>
    %52 = arith.addf %41, %51 : vector<8x128xf32>
    %53 = vector.broadcast %2 : vector<1x128xf32> to vector<8x128xf32>
    %54 = arith.addf %52, %53 : vector<8x128xf32>
    %55 = arith.addf %39, %54 : vector<8x128xf32>
    %cst_26 = arith.constant dense<0.000000e+00> : vector<8xf32>
    %56 = vector.multi_reduction <add>, %55, %cst_26 [1] : vector<8x128xf32> to vector<8xf32>
    %57 = vector.shape_cast %56 : vector<8xf32> to vector<8x1xf32>
    %cst_27 = arith.constant 3.125000e-02 : f32
    %58 = vector.broadcast %cst_27 : f32 to vector<8x1xf32>
    %59 = arith.mulf %57, %58 : vector<8x1xf32>
    %60 = vector.broadcast %59 : vector<8x1xf32> to vector<8x128xf32>
    %61 = arith.subf %55, %60 : vector<8x128xf32>
    %cst_28 = arith.constant 0.000000e+00 : f32
    %62 = vector.shape_cast %9 : vector<1x128xi1> to vector<1x128xi1>
    %63 = vector.broadcast %62 : vector<1x128xi1> to vector<8x128xi1>
    %64 = vector.broadcast %cst_28 : f32 to vector<8x128xf32>
    %65 = arith.select %63, %61, %64 : vector<8x128xi1>, vector<8x128xf32>
    %66 = arith.mulf %65, %65 : vector<8x128xf32>
    %cst_29 = arith.constant dense<0.000000e+00> : vector<8xf32>
    %67 = vector.multi_reduction <add>, %66, %cst_29 [1] : vector<8x128xf32> to vector<8xf32>
    %68 = vector.shape_cast %67 : vector<8xf32> to vector<8x1xf32>
    %cst_30 = arith.constant 3.125000e-02 : f32
    %69 = vector.broadcast %cst_30 : f32 to vector<8x1xf32>
    %70 = arith.mulf %68, %69 : vector<8x1xf32>
    %cst_31 = arith.constant 9.99999974E-6 : f32
    %71 = vector.broadcast %cst_31 : f32 to vector<8x1xf32>
    %72 = arith.addf %70, %71 : vector<8x1xf32>
    %73 = math.rsqrt %72 : vector<8x1xf32>
    %74 = vector.broadcast %73 : vector<8x1xf32> to vector<8x128xf32>
    %75 = arith.mulf %65, %74 : vector<8x128xf32>
    %76 = vector.broadcast %5 : vector<1x128xf32> to vector<8x128xf32>
    %77 = arith.mulf %75, %76 : vector<8x128xf32>
    %78 = vector.broadcast %6 : vector<1x128xf32> to vector<8x128xf32>
    %79 = arith.addf %77, %78 : vector<8x128xf32>
    %c0_32 = arith.constant 0 : index
    %c0_33 = arith.constant 0 : index
    %80 = vector.load %arg7[%c0_32, %c0_33] : memref<8x128xf32, #tpu.memory_space<vmem>>, vector<8x128xf32>
    tpu.vector_store %arg7[%c0_32, %c0_33], %79 {strides = array<i32>} : memref<8x128xf32, #tpu.memory_space<vmem>>, vector<8x128xf32>,
    return
  }
  func.func @transform_0(%arg0: i32) -> (i32, i32) {
    %c0_i32 = arith.constant 0 : i32
    %c0_i32_0 = arith.constant 0 : i32
    return %arg0, %c0_i32 : i32, i32
  }
  func.func @transform_1(%arg0: i32) -> (i32, i32) {
    %c0_i32 = arith.constant 0 : i32
    %c0_i32_0 = arith.constant 0 : i32
    %c0_i32_1 = arith.constant 0 : i32
    return %c0_i32, %c0_i32_0 : i32, i32
  }
  func.func @transform_2(%arg0: i32) -> (i32, i32) {
    %c0_i32 = arith.constant 0 : i32
    %c0_i32_0 = arith.constant 0 : i32
    %c0_i32_1 = arith.constant 0 : i32
    return %c0_i32, %c0_i32_0 : i32, i32
  }
  func.func @transform_3(%arg0: i32) -> (i32, i32) {
    %c0_i32 = arith.constant 0 : i32
    %c0_i32_0 = arith.constant 0 : i32
    %c0_i32_1 = arith.constant 0 : i32
    return %c0_i32, %c0_i32_0 : i32, i32
  }
  func.func @transform_4(%arg0: i32) -> (i32, i32) {
    %c0_i32 = arith.constant 0 : i32
    %c0_i32_0 = arith.constant 0 : i32
    %c0_i32_1 = arith.constant 0 : i32
    return %c0_i32, %c0_i32_0 : i32, i32
  }
  func.func @transform_5(%arg0: i32) -> (i32, i32) {
    %c0_i32 = arith.constant 0 : i32
    %c0_i32_0 = arith.constant 0 : i32
    %c0_i32_1 = arith.constant 0 : i32
    return %c0_i32, %c0_i32_0 : i32, i32
  }
  func.func @transform_6(%arg0: i32) -> (i32, i32) {
    %c0_i32 = arith.constant 0 : i32
    %c0_i32_0 = arith.constant 0 : i32
    return %arg0, %c0_i32 : i32, i32
  }
}

</mosaic_0001>

<llo_original>
// kernel: tpu_custom_call.1
$region0: #{tpu_custom_call.1}
  #allocation0 [shape = 'u32[]', space=smem, size = 0x4, offset = 0x4, fixed_abs, tag = 'smem constant byte address 0x4 - core index']
  #allocation1 [shape = 'u32[72,128]{1,0:T(1,128)}', space=vmem, size = 0x9000, scoped, tag = 'internal scratch']
  %s0 = inlined_call_operand.hbm [shape: f32[16,128], index: 0, kind: input, shape index: {}]
  %s1 = inlined_call_operand.hbm [shape: bf16[128,128], index: 1, kind: input, shape index: {}]
  %s2 = inlined_call_operand.hbm [shape: bf16[128,128], index: 2, kind: input, shape index: {}]
  %s3 = inlined_call_operand.vmem [shape: f32[1,128], index: 3, kind: input, shape index: {}]
  %s4 = inlined_call_operand.hbm [shape: bf16[128,128], index: 4, kind: input, shape index: {}]
  %s5 = inlined_call_operand.hbm [shape: f32[8,128], index: 5, kind: input, shape index: {}]
  %s6 = inlined_call_operand.hbm [shape: f32[16,128], index: 6, kind: output, shape index: {}]
  %s7 = sld [smem:[#allocation0]]
  $region77: #{tpu_custom_call.1} parent=0
    _
  %s9 = ssub.s32 1, %s7
  %s10 = scalar_select 0, %s9, %s7
  $region1: #{tpu_custom_call.1} parent=0
    #allocation2 [shape = 'u8[8192]{0}', space=vmem, size = 0x2000, scoped, tag = 'input window, operand 0']
    #allocation3 [shape = 's32[2]{0}', space=sflag, size = 0x8, scoped, tag = 'scoped memory for tpu_custom_call.1']
    #allocation4 [shape = 's32[2]{0}', space=sflag, size = 0x8, scoped, tag = 'scoped memory for tpu_custom_call.1']
    #allocation5 [shape = 'u8[32768]{0}', space=vmem, size = 0x8000, scoped, tag = 'input window, operand 1, single buffered']
    #allocation6 [shape = 's32[1]{0}', space=sflag, size = 0x4, scoped, tag = 'scoped memory for tpu_custom_call.1']
    #allocation7 [shape = 'u8[32768]{0}', space=vmem, size = 0x8000, scoped, tag = 'input window, operand 2, single buffered']
    #allocation8 [shape = 'u8[32768]{0}', space=vmem, size = 0x8000, scoped, tag = 'input window, operand 4, single buffered']
    #allocation9 [shape = 's32[1]{0}', space=sflag, size = 0x4, scoped, tag = 'scoped memory for tpu_custom_call.1']
    #allocation10 [shape = 'u8[4096]{0}', space=vmem, size = 0x1000, scoped, tag = 'input window, operand 5, single buffered']
    #allocation11 [shape = 'u8[8192]{0}', space=vmem, size = 0x2000, scoped, tag = 'output window, operand 0']
    %11 = vsyncpa [#allocation3], 0
    %s12 = scalar_lea.sflag [#allocation3], 1
    %13 = vsyncpa %s12, 0
    %14 = vsyncpa [#allocation6], 0
    %15 = vsyncpa [#allocation9], 0
    %16 = vsyncpa [#allocation4], 0
    %s17 = scalar_lea.sflag [#allocation4], 1
    %18 = vsyncpa %s17, 0
    loop: start=0, step=1, limit=4
    $region2: #{tpu_custom_call.1} parent=1 // loop_pre_header
      _
    $region3: #{tpu_custom_call.1} parent=1 // loop_header
      %s20 = sphi 0, %s24
      %p21 = scmp.ge.s32.totalorder %s20, 4
      %s30 = sphi 0, %s32
      %s33 = sphi 0, %s30
      %s34 = sphi 0, %s33
      %s50 = sphi 0, %s34
      %s54 = sphi 0, %s54
      %s56 = sphi 0, %s54
      %s57 = sphi 0, %s56
      %s71 = sphi 0, %s57
      %s75 = sphi 0, %s75
      %s77 = sphi 0, %s75
      %s78 = sphi 0, %s77
      %s92 = sphi 0, %s78
      %s96 = sphi 0, %s96
      %s98 = sphi 0, %s96
      %s99 = sphi 0, %s98
      %s113 = sphi 0, %s99
      %s117 = sphi 0, %s117
      %s119 = sphi 0, %s117
      %s120 = sphi 0, %s119
      %s134 = sphi 0, %s120
      %s138 = sphi 0, %s138
      %s140 = sphi 0, %s138
      %s141 = sphi 0, %s140
      %s155 = sphi 0, %s141
      %s161 = sphi 0, %s163
      %s164 = sphi 0, %s161
      %s165 = sphi 0, %s164
      %s181 = sphi 0, %s165
    $region4: #{tpu_custom_call.1} parent=1 // loop_header_branch
      %23 = sbr.rel (%p21) target = $region8
    $region5: #{tpu_custom_call.1} parent=1 // loop_body
      %s25 = ssub.s32 %s20, 1
      %s26 = ssub.s32 %s20, 2
      %s27 = sadd.s32 %s20, 1
      %s28 = ssub.s32 %s20, %s27
      %p29 = scmp.eq.s32.totalorder %s28, 0
      %s31 = sadd.s32 %s30, 1
      %s32 = scalar_select %p29, %s30, %s31
      %p35 = pneg %p29
      %p36 = scmp.eq.s32.totalorder %s20, 1
      %p37 = por %p35, %p36
      %p38 = scmp.ne.s32.totalorder %s30, %s33
      %p39 = scmp.eq.s32.totalorder %s20, 0
      %p40 = por %p38, %p39
      %p41 = scmp.ne.s32.totalorder %s30, %s33
      %p42 = scmp.eq.s32.totalorder %s25, 1
      %p43 = por %p41, %p42
      %p44 = scmp.ne.s32.totalorder %s33, %s34
      %p45 = scmp.eq.s32.totalorder %s25, 0
      %p46 = por %p44, %p45
      %p47 = scmp.ne.s32.totalorder %s33, %s34
      %p48 = scmp.eq.s32.totalorder %s26, 1
      %p49 = por %p47, %p48
      %p51 = scmp.ne.s32.totalorder %s34, %s50
      %p52 = scmp.eq.s32.totalorder %s26, 0
      %p53 = por %p51, %p52
      %s55 = sadd.s32 %s54, 1
      %p58 = scmp.eq.s32.totalorder %s20, 1
      %p59 = scmp.ne.s32.totalorder %s54, %s56
      %p60 = scmp.eq.s32.totalorder %s20, 0
      %p61 = por %p59, %p60
      %p62 = scmp.ne.s32.totalorder %s54, %s56
      %p63 = scmp.eq.s32.totalorder %s25, 1
      %p64 = por %p62, %p63
      %p65 = scmp.ne.s32.totalorder %s56, %s57
      %p66 = scmp.eq.s32.totalorder %s25, 0
      %p67 = por %p65, %p66
      %p68 = scmp.ne.s32.totalorder %s56, %s57
      %p69 = scmp.eq.s32.totalorder %s26, 1
      %p70 = por %p68, %p69
      %p72 = scmp.ne.s32.totalorder %s57, %s71
      %p73 = scmp.eq.s32.totalorder %s26, 0
      %p74 = por %p72, %p73
      %s76 = sadd.s32 %s75, 1
      %p79 = scmp.eq.s32.totalorder %s20, 1
      %p80 = scmp.ne.s32.totalorder %s75, %s77
      %p81 = scmp.eq.s32.totalorder %s20, 0
      %p82 = por %p80, %p81
      %p83 = scmp.ne.s32.totalorder %s75, %s77
      %p84 = scmp.eq.s32.totalorder %s25, 1
      %p85 = por %p83, %p84
      %p86 = scmp.ne.s32.totalorder %s77, %s78
      %p87 = scmp.eq.s32.totalorder %s25, 0
      %p88 = por %p86, %p87
      %p89 = scmp.ne.s32.totalorder %s77, %s78
      %p90 = scmp.eq.s32.totalorder %s26, 1
      %p91 = por %p89, %p90
      %p93 = scmp.ne.s32.totalorder %s78, %s92
      %p94 = scmp.eq.s32.totalorder %s26, 0
      %p95 = por %p93, %p94
      %s97 = sadd.s32 %s96, 1
      %p100 = scmp.eq.s32.totalorder %s20, 1
      %p101 = scmp.ne.s32.totalorder %s96, %s98
      %p102 = scmp.eq.s32.totalorder %s20, 0
      %p103 = por %p101, %p102
      %p104 = scmp.ne.s32.totalorder %s96, %s98
      %p105 = scmp.eq.s32.totalorder %s25, 1
      %p106 = por %p104, %p105
      %p107 = scmp.ne.s32.totalorder %s98, %s99
      %p108 = scmp.eq.s32.totalorder %s25, 0
      %p109 = por %p107, %p108
      %p110 = scmp.ne.s32.totalorder %s98, %s99
      %p111 = scmp.eq.s32.totalorder %s26, 1
      %p112 = por %p110, %p111
      %p114 = scmp.ne.s32.totalorder %s99, %s113
      %p115 = scmp.eq.s32.totalorder %s26, 0
      %p116 = por %p114, %p115
      %s118 = sadd.s32 %s117, 1
      %p121 = scmp.eq.s32.totalorder %s20, 1
      %p122 = scmp.ne.s32.totalorder %s117, %s119
      %p123 = scmp.eq.s32.totalorder %s20, 0
      %p124 = por %p122, %p123
      %p125 = scmp.ne.s32.totalorder %s117, %s119
      %p126 = scmp.eq.s32.totalorder %s25, 1
      %p127 = por %p125, %p126
      %p128 = scmp.ne.s32.totalorder %s119, %s120
      %p129 = scmp.eq.s32.totalorder %s25, 0
      %p130 = por %p128, %p129
      %p131 = scmp.ne.s32.totalorder %s119, %s120
      %p132 = scmp.eq.s32.totalorder %s26, 1
      %p133 = por %p131, %p132
      %p135 = scmp.ne.s32.totalorder %s120, %s134
      %p136 = scmp.eq.s32.totalorder %s26, 0
      %p137 = por %p135, %p136
      %s139 = sadd.s32 %s138, 1
      %p142 = scmp.eq.s32.totalorder %s20, 1
      %p143 = scmp.ne.s32.totalorder %s138, %s140
      %p144 = scmp.eq.s32.totalorder %s20, 0
      %p145 = por %p143, %p144
      %p146 = scmp.ne.s32.totalorder %s138, %s140
      %p147 = scmp.eq.s32.totalorder %s25, 1
      %p148 = por %p146, %p147
      %p149 = scmp.ne.s32.totalorder %s140, %s141
      %p150 = scmp.eq.s32.totalorder %s25, 0
      %p151 = por %p149, %p150
      %p152 = scmp.ne.s32.totalorder %s140, %s141
      %p153 = scmp.eq.s32.totalorder %s26, 1
      %p154 = por %p152, %p153
      %p156 = scmp.ne.s32.totalorder %s141, %s155
      %p157 = scmp.eq.s32.totalorder %s26, 0
      %p158 = por %p156, %p157
      %s159 = ssub.s32 %s20, %s27
      %p160 = scmp.eq.s32.totalorder %s159, 0
      %s162 = sadd.s32 %s161, 1
      %s163 = scalar_select %p160, %s161, %s162
      %p166 = pneg %p160
      %p167 = scmp.eq.s32.totalorder %s20, 1
      %p168 = por %p166, %p167
      %p169 = scmp.ne.s32.totalorder %s161, %s164
      %p170 = scmp.eq.s32.totalorder %s20, 0
      %p171 = por %p169, %p170
      %p172 = scmp.ne.s32.totalorder %s161, %s164
      %p173 = scmp.eq.s32.totalorder %s25, 1
      %p174 = por %p172, %p173
      %p175 = scmp.ne.s32.totalorder %s164, %s165
      %p176 = scmp.eq.s32.totalorder %s25, 0
      %p177 = por %p175, %p176
      %p178 = scmp.ne.s32.totalorder %s164, %s165
      %p179 = scmp.eq.s32.totalorder %s26, 1
      %p180 = por %p178, %p179
      %p182 = scmp.ne.s32.totalorder %s165, %s181
      %p183 = scmp.eq.s32.totalorder %s26, 0
      %p184 = por %p182, %p183
      %p185 = scmp.le.s32.totalorder 1, %s20
      %p186 = scmp.lt.s32.totalorder %s20, 3
      %p187 = pnand %p185, %p186
      %p188 = pneg %p187
      // Predicated region
      $region9: #{tpu_custom_call.1} parent=5 // pred_check
        _
      $region10: #{tpu_custom_call.1} parent=5 // pred_check_branch
        %190 = sbr.rel (%p187) target = $region12
      $region11: #{tpu_custom_call.1} parent=5 // pred_region
        %s191 = ssub.s32 %s20, 1
        // Predicated region
        $region13: #{tpu_custom_call.1} parent=11 // pred_check
          %p192 = pneg %p67
        $region14: #{tpu_custom_call.1} parent=11 // pred_check_branch
          %194 = sbr.rel (%p192) target = $region16
        $region15: #{tpu_custom_call.1} parent=11 // pred_region
          %196 = vsyncadd [#allocation6], 0
          %s197 = sshll.u32 %s1, 4
          %s198 = int_to_ptr.hbm [resolvable:$true] %s197
          %s199 = sshll.u32 [#allocation5], 4
          %s200 = int_to_ptr.vmem [resolvable:$true] %s199
          %205 = dma.hbm_to_vmem [thread:$0]  %s198, 1024, %s200, [#allocation6], 64, 64, 4
        $region16: #{tpu_custom_call.1} parent=11 // pred_fallthru
          _
        // Predicated region
        $region17: #{tpu_custom_call.1} parent=11 // pred_check
          %p206 = pneg %p88
        $region18: #{tpu_custom_call.1} parent=11 // pred_check_branch
          %208 = sbr.rel (%p206) target = $region20
        $region19: #{tpu_custom_call.1} parent=11 // pred_region
          %210 = vsyncadd [#allocation6], 0
          %s211 = sshll.u32 %s2, 4
          %s212 = int_to_ptr.hbm [resolvable:$true] %s211
          %s213 = sshll.u32 [#allocation7], 4
          %s214 = int_to_ptr.vmem [resolvable:$true] %s213
          %219 = dma.hbm_to_vmem [thread:$0]  %s212, 1024, %s214, [#allocation6], 64, 64, 4
        $region20: #{tpu_custom_call.1} parent=11 // pred_fallthru
          _
        // Predicated region
        $region21: #{tpu_custom_call.1} parent=11 // pred_check
          %p220 = pneg %p109
        $region22: #{tpu_custom_call.1} parent=11 // pred_check_branch
          %222 = sbr.rel (%p220) target = $region24
        $region23: #{tpu_custom_call.1} parent=11 // pred_region
          _
        $region24: #{tpu_custom_call.1} parent=11 // pred_fallthru
          _
        // Predicated region
        $region25: #{tpu_custom_call.1} parent=11 // pred_check
          %p223 = pneg %p130
        $region26: #{tpu_custom_call.1} parent=11 // pred_check_branch
          %225 = sbr.rel (%p223) target = $region28
        $region27: #{tpu_custom_call.1} parent=11 // pred_region
          %227 = vsyncadd [#allocation9], 0
          %s228 = sshll.u32 %s4, 4
          %s229 = int_to_ptr.hbm [resolvable:$true] %s228
          %s230 = sshll.u32 [#allocation8], 4
          %s231 = int_to_ptr.vmem [resolvable:$true] %s230
          %236 = dma.hbm_to_vmem [thread:$0]  %s229, 1024, %s231, [#allocation9], 64, 64, 4
        $region28: #{tpu_custom_call.1} parent=11 // pred_fallthru
          _
        // Predicated region
        $region29: #{tpu_custom_call.1} parent=11 // pred_check
          %p237 = pneg %p151
        $region30: #{tpu_custom_call.1} parent=11 // pred_check_branch
          %239 = sbr.rel (%p237) target = $region32
        $region31: #{tpu_custom_call.1} parent=11 // pred_region
          %241 = vsyncadd [#allocation9], 0
          %s243 = sshll.u32 %s5, 4
          %s244 = int_to_ptr.hbm [resolvable:$true] %s243
          %s245 = sshll.u32 [#allocation10], 4
          %s246 = int_to_ptr.vmem [resolvable:$true] %s245
          %248 = dma.hbm_to_vmem [thread:$0]  %s244, 128, %s246, [#allocation9]
        $region32: #{tpu_custom_call.1} parent=11 // pred_fallthru
          _
      $region12: #{tpu_custom_call.1} parent=5 // pred_fallthru
        _
      %p249 = scmp.lt.s32.totalorder %s20, 2
      // Predicated region
      $region33: #{tpu_custom_call.1} parent=5 // pred_check
        %p250 = pneg %p249
      $region34: #{tpu_custom_call.1} parent=5 // pred_check_branch
        %252 = sbr.rel (%p250) target = $region36
      $region35: #{tpu_custom_call.1} parent=5 // pred_region
        // Predicated region
        $region37: #{tpu_custom_call.1} parent=35 // pred_check
          %p253 = pneg %p40
        $region38: #{tpu_custom_call.1} parent=35 // pred_check_branch
          %255 = sbr.rel (%p253) target = $region40
        $region39: #{tpu_custom_call.1} parent=35 // pred_region
          %s256 = sand.u32 %s30, 1
          %s257 = scalar_lea.sflag [#allocation3], %s256
          %s258 = sand.u32 %s30, 1
          %s259 = smul.addr %s258, 8
          %s260 = scalar_lea.vmem [#allocation2], %s259
          %262 = vsyncadd %s257, 0
          %s263 = smul.addr %s20, 8
          %s264 = scalar_lea.hbm %s0, %s263
          %s266 = sshll.u32 %s264, 4
          %s267 = int_to_ptr.hbm [resolvable:$true] %s266
          %s268 = sshll.u32 %s260, 4
          %s269 = int_to_ptr.vmem [resolvable:$true] %s268
          %271 = dma.hbm_to_vmem [thread:$0]  %s267, 128, %s269, %s257
        $region40: #{tpu_custom_call.1} parent=35 // pred_fallthru
          _
      $region36: #{tpu_custom_call.1} parent=5 // pred_fallthru
        _
      %p272 = scmp.le.s32.totalorder 1, %s20
      %p273 = scmp.lt.s32.totalorder %s20, 3
      %p274 = pnand %p272, %p273
      %p275 = pneg %p274
      // Predicated region
      $region41: #{tpu_custom_call.1} parent=5 // pred_check
        _
      $region42: #{tpu_custom_call.1} parent=5 // pred_check_branch
        %277 = sbr.rel (%p274) target = $region44
      $region43: #{tpu_custom_call.1} parent=5 // pred_region
        %s278 = ssub.s32 %s20, 1
        %s279 = sand.u32 %s33, 1
        %s280 = scalar_lea.sflag [#allocation3], %s279
        %s281 = sand.u32 %s33, 1
        %s282 = smul.addr %s281, 8
        %s283 = scalar_lea.vmem [#allocation2], %s282
        // Predicated region
        $region45: #{tpu_custom_call.1} parent=43 // pred_check
          %p284 = pneg %p46
        $region46: #{tpu_custom_call.1} parent=43 // pred_check_branch
          %286 = sbr.rel (%p284) target = $region48
        $region47: #{tpu_custom_call.1} parent=43 // pred_region
          %288 = dma.done %s280, 128
        $region48: #{tpu_custom_call.1} parent=43 // pred_fallthru
          _
        // Predicated region
        $region49: #{tpu_custom_call.1} parent=43 // pred_check
          %p289 = pneg %p67
        $region50: #{tpu_custom_call.1} parent=43 // pred_check_branch
          %291 = sbr.rel (%p289) target = $region52
        $region51: #{tpu_custom_call.1} parent=43 // pred_region
          %293 = dma.done [#allocation6], 1024
        $region52: #{tpu_custom_call.1} parent=43 // pred_fallthru
          _
        // Predicated region
        $region53: #{tpu_custom_call.1} parent=43 // pred_check
          %p294 = pneg %p88
        $region54: #{tpu_custom_call.1} parent=43 // pred_check_branch
          %296 = sbr.rel (%p294) target = $region56
        $region55: #{tpu_custom_call.1} parent=43 // pred_region
          %298 = dma.done [#allocation6], 1024
        $region56: #{tpu_custom_call.1} parent=43 // pred_fallthru
          _
        // Predicated region
        $region57: #{tpu_custom_call.1} parent=43 // pred_check
          %p299 = pneg %p130
        $region58: #{tpu_custom_call.1} parent=43 // pred_check_branch
          %301 = sbr.rel (%p299) target = $region60
        $region59: #{tpu_custom_call.1} parent=43 // pred_region
          %303 = dma.done [#allocation9], 1024
        $region60: #{tpu_custom_call.1} parent=43 // pred_fallthru
          _
        // Predicated region
        $region61: #{tpu_custom_call.1} parent=43 // pred_check
          %p304 = pneg %p151
        $region62: #{tpu_custom_call.1} parent=43 // pred_check_branch
          %306 = sbr.rel (%p304) target = $region64
        $region63: #{tpu_custom_call.1} parent=43 // pred_region
          %308 = dma.done [#allocation9], 128
        $region64: #{tpu_custom_call.1} parent=43 // pred_fallthru
          _
        %s309 = sand.u32 %s33, 1
        %s310 = scalar_lea.sflag [#allocation3], %s309
        %s311 = sand.u32 %s33, 1
        %s312 = smul.addr %s311, 8
        %s313 = scalar_lea.vmem [#allocation2], %s312
        %p314 = pneg %p46
        %p315 = pneg %p43
        %p316 = pneg %p67
        %p317 = pneg %p64
        %p318 = pneg %p88
        %p319 = pneg %p85
        %p320 = pneg %p109
        %p321 = pneg %p106
        %p322 = pneg %p130
        %p323 = pneg %p127
        %p324 = pneg %p151
        %p325 = pneg %p148
        %p326 = pneg %p177
        %p327 = pneg %p174
        %s328 = sand.u32 %s164, 1
        %s329 = scalar_lea.sflag [#allocation4], %s328
        %s330 = sand.u32 %s164, 1
        %s331 = smul.addr %s330, 8
        %s332 = scalar_lea.vmem [#allocation11], %s331
        %v333 = vld [vmem:[%s283] sm:$0xff]
        %v334 = vld [vmem:[#allocation10] sm:$0x1]
        %v335 = vld [vmem:[#allocation10 + $0x1] sm:$0x1]
        %v336 = vld [vmem:[#allocation10 + $0x2] sm:$0x1]
        %v337 = vld [vmem:[#allocation10 + $0x3] sm:$0x1]
        %v338 = vld [vmem:[#allocation10 + $0x4] sm:$0x1]
        %v339 = vld [vmem:[#allocation10 + $0x5] sm:$0x1]
        %v340 = vlaneseq
        %v341 = vand.u32 %v340, 127
        %vm342 = vcmp.lt.s32.totalorder %v341, 32
        %v343 = vpack.c.bf16 %v333, %v333
        %v344 = vld [vmem:[#allocation5] sm:$0xf]
        %v345 = vld [vmem:[#allocation5 + $0x4] sm:$0xf]
        %v346 = vld [vmem:[#allocation5 + $0x8] sm:$0xf]
        %v347 = vld [vmem:[#allocation5 + $0xc] sm:$0xf]
        %v348 = vld [vmem:[#allocation5 + $0x10] sm:$0xf]
        %v349 = vld [vmem:[#allocation5 + $0x14] sm:$0xf]
        %v350 = vld [vmem:[#allocation5 + $0x18] sm:$0xf]
        %v351 = vld [vmem:[#allocation5 + $0x1c] sm:$0xf]
        %v352 = vld [vmem:[#allocation5 + $0x20] sm:$0xf]
        %v353 = vld [vmem:[#allocation5 + $0x24] sm:$0xf]
        %v354 = vld [vmem:[#allocation5 + $0x28] sm:$0xf]
        %v355 = vld [vmem:[#allocation5 + $0x2c] sm:$0xf]
        %v356 = vld [vmem:[#allocation5 + $0x30] sm:$0xf]
        %v357 = vld [vmem:[#allocation5 + $0x34] sm:$0xf]
        %v358 = vld [vmem:[#allocation5 + $0x38] sm:$0xf]
        %v359 = vld [vmem:[#allocation5 + $0x3c] sm:$0xf]
        %v360 = vperm.slane %v334, 0
        %v377 = vunpack.c.l.b16 %v344
        %v378 = vunpack.c.l.b16 %v345
        %v379 = vunpack.c.l.b16 %v346
        %v380 = vunpack.c.l.b16 %v347
        %v381 = vunpack.c.l.b16 %v348
        %v382 = vunpack.c.l.b16 %v349
        %v383 = vunpack.c.l.b16 %v350
        %v384 = vunpack.c.l.b16 %v351
        %v385 = vunpack.c.l.b16 %v352
        %v386 = vunpack.c.l.b16 %v353
        %v387 = vunpack.c.l.b16 %v354
        %v388 = vunpack.c.l.b16 %v355
        %v389 = vunpack.c.l.b16 %v356
        %v390 = vunpack.c.l.b16 %v357
        %v391 = vunpack.c.l.b16 %v358
        %v392 = vunpack.c.l.b16 %v359
        %v393 = vpack.c.b16 %v378, %v377
        %v394 = vpack.c.b16 %v380, %v379
        %v395 = vpack.c.b16 %v382, %v381
        %v396 = vpack.c.b16 %v384, %v383
        %v397 = vpack.c.b16 %v386, %v385
        %v398 = vpack.c.b16 %v388, %v387
        %v399 = vpack.c.b16 %v390, %v389
        %v400 = vpack.c.b16 %v392, %v391
        %409 = vmatpush.bf16.msra.mxu0 %v400
        %410 = vmatpush.bf16.msra.mxu0 %v399
        %411 = vmatpush.bf16.msra.mxu0 %v398
        %412 = vmatpush.bf16.msra.mxu0 %v397
        %413 = vmatpush.bf16.msra.mxu0 %v396
        %414 = vmatpush.bf16.msra.mxu0 %v395
        %415 = vmatpush.bf16.msra.mxu0 %v394
        %416 = vmatpush.bf16.msra.mxu0 %v393
        %417 = vmatmul.bf16.gmra.mxu0 %v343
        %v418 = vpop.f32.mrf.mxu0
        %v419 = vadd.f32 %v360, %v418
        %v420 = vpop.f32.mrf.mxu0
        %421 = vdwg.mxu0
        %v422 = vadd.f32 %v333, %v419
        %423 = vadd.xlane.f32.xlu0 %v422
        %v424 = vpop.xlane.xlu0 %423
        %v425 = vmul.f32 %v424, 0.03125
        %v426 = vsub.f32 %v422, %v425
        %v427 = vsel %vm342, 1, 0
        %vm428 = vcmp.eq.s32.totalorder %v427, 1
        %v429 = vsel %vm428, %v426, 0.0
        %v430 = vmul.f32 %v429, %v429
        %431 = vadd.xlane.f32.xlu0 %v430
        %v432 = vpop.xlane.xlu0 %431
        %v433 = vmul.f32 %v432, 0.03125
        %v434 = vadd.f32 %v433, 1e-05
        %v435 = vrsqrt.pop %v434
        %v436 = vmul.f32 %v435, %v434
        %v437 = vmul.f32 %v436, %v435
        %v438 = vmul.f32 0.5, %v437
        %v439 = vsub.f32 1.5, %v438
        %v440 = vmul.f32 %v435, %v439
        %vm441 = vweird.f32 %v434
        %vm442 = vweird.f32 %v435
        %vm443 = vmor %vm441, %vm442
        %v444 = vsel %vm443, %v435, %v440
        %v445 = vmul.f32 %v429, %v444
        %v446 = vperm.slane %v336, 0
        %v447 = vmul.f32 %v445, %v446
        %v448 = vperm.slane %v337, 0
        %v449 = vadd.f32 %v447, %v448
        %v450 = vpack.c.bf16 %v449, %v449
        %v451 = vld [vmem:[#allocation7] sm:$0xf]
        %v452 = vld [vmem:[#allocation7 + $0x4] sm:$0xf]
        %v453 = vld [vmem:[#allocation7 + $0x8] sm:$0xf]
        %v454 = vld [vmem:[#allocation7 + $0xc] sm:$0xf]
        %v455 = vld [vmem:[#allocation7 + $0x10] sm:$0xf]
        %v456 = vld [vmem:[#allocation7 + $0x14] sm:$0xf]
        %v457 = vld [vmem:[#allocation7 + $0x18] sm:$0xf]
        %v458 = vld [vmem:[#allocation7 + $0x1c] sm:$0xf]
        %v459 = vld [vmem:[#allocation7 + $0x20] sm:$0xf]
        %v460 = vld [vmem:[#allocation7 + $0x24] sm:$0xf]
        %v461 = vld [vmem:[#allocation7 + $0x28] sm:$0xf]
        %v462 = vld [vmem:[#allocation7 + $0x2c] sm:$0xf]
        %v463 = vld [vmem:[#allocation7 + $0x30] sm:$0xf]
        %v464 = vld [vmem:[#allocation7 + $0x34] sm:$0xf]
        %v465 = vld [vmem:[#allocation7 + $0x38] sm:$0xf]
        %v466 = vld [vmem:[#allocation7 + $0x3c] sm:$0xf]
        %v467 = vld [vmem:[%s3] sm:$0x1]
        %v469 = vperm.slane %v467, 0
        %v487 = vunpack.c.l.b16 %v451
        %v488 = vunpack.c.l.b16 %v452
        %v489 = vunpack.c.l.b16 %v453
        %v490 = vunpack.c.l.b16 %v454
        %v491 = vunpack.c.l.b16 %v455
        %v492 = vunpack.c.l.b16 %v456
        %v493 = vunpack.c.l.b16 %v457
        %v494 = vunpack.c.l.b16 %v458
        %v495 = vunpack.c.l.b16 %v459
        %v496 = vunpack.c.l.b16 %v460
        %v497 = vunpack.c.l.b16 %v461
        %v498 = vunpack.c.l.b16 %v462
        %v499 = vunpack.c.l.b16 %v463
        %v500 = vunpack.c.l.b16 %v464
        %v501 = vunpack.c.l.b16 %v465
        %v502 = vunpack.c.l.b16 %v466
        %v503 = vpack.c.b16 %v488, %v487
        %v504 = vpack.c.b16 %v490, %v489
        %v505 = vpack.c.b16 %v492, %v491
        %v506 = vpack.c.b16 %v494, %v493
        %v507 = vpack.c.b16 %v496, %v495
        %v508 = vpack.c.b16 %v498, %v497
        %v509 = vpack.c.b16 %v500, %v499
        %v510 = vpack.c.b16 %v502, %v501
        %519 = vmatpush.bf16.msra.mxu0 %v510
        %520 = vmatpush.bf16.msra.mxu0 %v509
        %521 = vmatpush.bf16.msra.mxu0 %v508
        %522 = vmatpush.bf16.msra.mxu0 %v507
        %523 = vmatpush.bf16.msra.mxu0 %v506
        %524 = vmatpush.bf16.msra.mxu0 %v505
        %525 = vmatpush.bf16.msra.mxu0 %v504
        %526 = vmatpush.bf16.msra.mxu0 %v503
        %527 = vmatmul.bf16.gmra.mxu0 %v450
        %v528 = vpop.f32.mrf.mxu0
        %v529 = vadd.f32 %v469, %v528
        %v530 = vpop.f32.mrf.mxu0
        %531 = vdwg.mxu0
        %v532 = vmax.f32 %v529, 0.0
        %v533 = vpack.c.bf16 %v532, %v532
        %v534 = vld [vmem:[#allocation8] sm:$0xf]
        %v535 = vld [vmem:[#allocation8 + $0x4] sm:$0xf]
        %v536 = vld [vmem:[#allocation8 + $0x8] sm:$0xf]
        %v537 = vld [vmem:[#allocation8 + $0xc] sm:$0xf]
        %v538 = vld [vmem:[#allocation8 + $0x10] sm:$0xf]
        %v539 = vld [vmem:[#allocation8 + $0x14] sm:$0xf]
        %v540 = vld [vmem:[#allocation8 + $0x18] sm:$0xf]
        %v541 = vld [vmem:[#allocation8 + $0x1c] sm:$0xf]
        %v542 = vld [vmem:[#allocation8 + $0x20] sm:$0xf]
        %v543 = vld [vmem:[#allocation8 + $0x24] sm:$0xf]
        %v544 = vld [vmem:[#allocation8 + $0x28] sm:$0xf]
        %v545 = vld [vmem:[#allocation8 + $0x2c] sm:$0xf]
        %v546 = vld [vmem:[#allocation8 + $0x30] sm:$0xf]
        %v547 = vld [vmem:[#allocation8 + $0x34] sm:$0xf]
        %v548 = vld [vmem:[#allocation8 + $0x38] sm:$0xf]
        %v549 = vld [vmem:[#allocation8 + $0x3c] sm:$0xf]
        %v550 = vperm.slane %v335, 0
        %v567 = vunpack.c.l.b16 %v534
        %v568 = vunpack.c.l.b16 %v535
        %v569 = vunpack.c.l.b16 %v536
        %v570 = vunpack.c.l.b16 %v537
        %v571 = vunpack.c.l.b16 %v538
        %v572 = vunpack.c.l.b16 %v539
        %v573 = vunpack.c.l.b16 %v540
        %v574 = vunpack.c.l.b16 %v541
        %v575 = vunpack.c.l.b16 %v542
        %v576 = vunpack.c.l.b16 %v543
        %v577 = vunpack.c.l.b16 %v544
        %v578 = vunpack.c.l.b16 %v545
        %v579 = vunpack.c.l.b16 %v546
        %v580 = vunpack.c.l.b16 %v547
        %v581 = vunpack.c.l.b16 %v548
        %v582 = vunpack.c.l.b16 %v549
        %v583 = vpack.c.b16 %v568, %v567
        %v584 = vpack.c.b16 %v570, %v569
        %v585 = vpack.c.b16 %v572, %v571
        %v586 = vpack.c.b16 %v574, %v573
        %v587 = vpack.c.b16 %v576, %v575
        %v588 = vpack.c.b16 %v578, %v577
        %v589 = vpack.c.b16 %v580, %v579
        %v590 = vpack.c.b16 %v582, %v581
        %599 = vmatpush.bf16.msra.mxu0 %v590
        %600 = vmatpush.bf16.msra.mxu0 %v589
        %601 = vmatpush.bf16.msra.mxu0 %v588
        %602 = vmatpush.bf16.msra.mxu0 %v587
        %603 = vmatpush.bf16.msra.mxu0 %v586
        %604 = vmatpush.bf16.msra.mxu0 %v585
        %605 = vmatpush.bf16.msra.mxu0 %v584
        %606 = vmatpush.bf16.msra.mxu0 %v583
        %607 = vmatmul.bf16.gmra.mxu0 %v533
        %v608 = vpop.f32.mrf.mxu0
        %v609 = vadd.f32 %v550, %v608
        %v610 = vpop.f32.mrf.mxu0
        %611 = vdwg.mxu0
        %v612 = vadd.f32 %v449, %v609
        %613 = vadd.xlane.f32.xlu0 %v612
        %v614 = vpop.xlane.xlu0 %613
        %v615 = vmul.f32 %v614, 0.03125
        %v616 = vsub.f32 %v612, %v615
        %v617 = vsel %vm428, %v616, 0.0
        %v618 = vmul.f32 %v617, %v617
        %619 = vadd.xlane.f32.xlu0 %v618
        %v620 = vpop.xlane.xlu0 %619
        %v621 = vmul.f32 %v620, 0.03125
        %v622 = vadd.f32 %v621, 1e-05
        %v623 = vrsqrt.pop %v622
        %v624 = vmul.f32 %v623, %v622
        %v625 = vmul.f32 %v624, %v623
        %v626 = vmul.f32 0.5, %v625
        %v627 = vsub.f32 1.5, %v626
        %v628 = vmul.f32 %v623, %v627
        %vm629 = vweird.f32 %v622
        %vm630 = vweird.f32 %v623
        %vm631 = vmor %vm629, %vm630
        %v632 = vsel %vm631, %v623, %v628
        %v633 = vmul.f32 %v617, %v632
        %v634 = vperm.slane %v338, 0
        %v635 = vmul.f32 %v633, %v634
        %v636 = vperm.slane %v339, 0
        %v637 = vadd.f32 %v635, %v636
        %638 = vst [vmem:[%s332] sm:$0xff] %v637
        %s639 = sand.u32 %s164, 1
        %s640 = scalar_lea.sflag [#allocation4], %s639
        %s641 = sand.u32 %s164, 1
        %s642 = smul.addr %s641, 8
        %s643 = scalar_lea.vmem [#allocation11], %s642
        // Predicated region
        $region65: #{tpu_custom_call.1} parent=43 // pred_check
          %p644 = pneg %p174
        $region66: #{tpu_custom_call.1} parent=43 // pred_check_branch
          %646 = sbr.rel (%p644) target = $region68
        $region67: #{tpu_custom_call.1} parent=43 // pred_region
          %648 = vsyncadd %s640, 0
          %s649 = smul.addr %s25, 8
          %s650 = scalar_lea.hbm %s6, %s649
          %s652 = sshll.u32 %s643, 4
          %s653 = int_to_ptr.vmem [resolvable:$true] %s652
          %s654 = sshll.u32 %s650, 4
          %s655 = int_to_ptr.hbm [resolvable:$true] %s654
          %657 = dma.vmem_to_hbm [thread:$0]  %s653, 128, %s655, %s640
        $region68: #{tpu_custom_call.1} parent=43 // pred_fallthru
          _
      $region44: #{tpu_custom_call.1} parent=5 // pred_fallthru
        _
      %p658 = scmp.le.s32.totalorder 2, %s20
      // Predicated region
      $region69: #{tpu_custom_call.1} parent=5 // pred_check
        %p659 = pneg %p658
      $region70: #{tpu_custom_call.1} parent=5 // pred_check_branch
        %661 = sbr.rel (%p659) target = $region72
      $region71: #{tpu_custom_call.1} parent=5 // pred_region
        %s662 = ssub.s32 %s20, 2
        // Predicated region
        $region73: #{tpu_custom_call.1} parent=71 // pred_check
          %p663 = pneg %p180
        $region74: #{tpu_custom_call.1} parent=71 // pred_check_branch
          %665 = sbr.rel (%p663) target = $region76
        $region75: #{tpu_custom_call.1} parent=71 // pred_region
          %s666 = sand.u32 %s165, 1
          %s667 = scalar_lea.sflag [#allocation4], %s666
          %s668 = sand.u32 %s165, 1
          %s669 = smul.addr %s668, 8
          %s670 = scalar_lea.vmem [#allocation11], %s669
          %672 = dma.done %s667, 128
        $region76: #{tpu_custom_call.1} parent=71 // pred_fallthru
          _
      $region72: #{tpu_custom_call.1} parent=5 // pred_fallthru
        _
    $region6: #{tpu_custom_call.1} parent=1 // loop_footer
      %s24 = sadd.s32 1, %s20
    $region7: #{tpu_custom_call.1} parent=1 // loop_footer_branch
      %19 = sbr.rel target = $region3
    $region8: #{tpu_custom_call.1} parent=1 // loop_exit
      _
    %673 = vsyncpa [#allocation3], 1
    %s674 = scalar_lea.sflag [#allocation3], 1
    %675 = vsyncpa %s674, 1
    %676 = vsyncpa [#allocation6], 1
    %677 = vsyncpa [#allocation9], 1
    %678 = vsyncpa [#allocation4], 1
    %s679 = scalar_lea.sflag [#allocation4], 1
    %680 = vsyncpa %s679, 1

</llo_original>
